<compile_context>
chip_gen: v5e
topology: v5e:2x2
jax: 0.10.0
libtpu: 0.0.40
codegen_flags: <defaults>
</compile_context>

<pallas_src>
import functools

import jax
import jax.numpy as jnp
from jax import lax
from jax.experimental import pallas as pl
from jax.experimental.pallas import tpu as pltpu


# -----------------------------------------------------------------------------
# Pallas kernel (NCW layout: rows = channels, lanes = sequence positions)
# -----------------------------------------------------------------------------
def _fusion_kernel(x_ref, w1_ref, b1_ref, w2_ref, b2_ref, out_ref, col_ref,
                   *, S, C, n_off, Bt):
    """One grid step = Bt batch rows.

    x_ref:   (Bt, C, S + 2*max_pad)  zero-padded input slab (NCW, compute dtype)
    w1_ref:  (NC*C, n_off*C)         offset-packed first-conv weights (transposed)
    b1_ref:  (NC*C, 1)               concatenated first-conv biases (f32)
    w2_ref:  (C, NC*C)               fusion-weight-scaled pointwise conv (transposed)
    b2_ref:  (C, 1)                  fusion-weighted sum of pointwise biases (f32)
    out_ref: (Bt, C, S)              output slab (NCW, f32)
    col_ref: (n_off*C, Bt*S)         im2col VMEM scratch (compute dtype)
    """
    # --- im2col: write every shifted window exactly once, lane-dense along S.
    for b in range(Bt):
        xb = x_ref[b]                                            # (C, S_pad)
        for off in range(n_off):
            col_ref[off * C:(off + 1) * C, b * S:(b + 1) * S] = xb[:, off:off + S]

    # --- ALL components' first convs as ONE matmul (K = n_off*C), f32 acc.
    h = jnp.dot(w1_ref[...], col_ref[...],
                preferred_element_type=jnp.float32) + b1_ref[...]
    h = jnp.maximum(h, 0.0)                                      # ReLU (f32)

    # --- pointwise Conv1d(k=1) + softmax fusion folded into one matmul.
    y = jnp.dot(w2_ref[...], h.astype(w2_ref.dtype),
                preferred_element_type=jnp.float32) + b2_ref[...]

    # --- lane-dense (C, S) stores, one per batch row in this block.
    for b in range(Bt):
        out_ref[b] = y[:, b * S:(b + 1) * S]


# -----------------------------------------------------------------------------
# Weight packing: offset-packed W1, softmax fusion folded into W2/b2
# -----------------------------------------------------------------------------
def _pack_weights(params, recon_weights, C):
    NC = len(params)
    pads = [int(p["pad"]) for p in params]
    max_pad = max(pads)
    n_off = 2 * max_pad + 1
    w_soft = jax.nn.softmax(recon_weights.astype(jnp.float32))

    W1T = jnp.zeros((NC * C, n_off * C), jnp.float32)   # [cout-block, off*C+cin]
    b1T = jnp.zeros((NC * C, 1), jnp.float32)
    W2T = jnp.zeros((C, NC * C), jnp.float32)           # [cout, j*C+cin_h]
    b2T = jnp.zeros((C, 1), jnp.float32)

    for j, p in enumerate(params):
        K = int(p["W1"].shape[-1])
        P = pads[j]
        for k in range(K):
            off = max_pad - P + k                        # window shift of this tap
            W1T = W1T.at[j * C:(j + 1) * C, off * C:(off + 1) * C].set(
                p["W1"][:, :, k].astype(jnp.float32))
        b1T = b1T.at[j * C:(j + 1) * C, 0].set(p["b1"].astype(jnp.float32))
        W2T = W2T.at[:, j * C:(j + 1) * C].set(
            w_soft[j] * p["W2"][:, :, 0].astype(jnp.float32))
        b2T = b2T + (w_soft[j] * p["b2"].astype(jnp.float32)).reshape(C, 1)

    return W1T, b1T, W2T, b2T, max_pad, n_off


# -----------------------------------------------------------------------------
# VMEM budgeting with (8,128) tile padding
# -----------------------------------------------------------------------------
def _round_up(v, m):
    return -(-v // m) * m


def _padded_2d_bytes(rows, cols, itemsize):
    """Bytes of a (rows, cols) slab after sublane / 128-lane tile padding."""
    sublanes = 8 * (4 // itemsize)      # 8 rows per tile for f32, 16 for bf16
    return _round_up(rows, sublanes) * _round_up(max(cols, 1), 128) * itemsize


def _step_vmem_bytes(Bt, S, S_pad, C, NC, n_off, in_itemsize):
    """Conservative per-grid-step VMEM footprint (tile-padding aware)."""
    f32 = 4
    x_blk = 2 * Bt * _padded_2d_bytes(C, S_pad, in_itemsize)   # double-buffered in
    o_blk = 2 * Bt * _padded_2d_bytes(C, S, f32)               # double-buffered out
    col = _padded_2d_bytes(n_off * C, Bt * S, in_itemsize)     # im2col scratch
    h = 2 * _padded_2d_bytes(NC * C, Bt * S, f32)              # hidden + relu/cast copy
    y = _padded_2d_bytes(C, Bt * S, f32)
    w = 2 * (_padded_2d_bytes(NC * C, n_off * C, in_itemsize)
             + _padded_2d_bytes(C, NC * C, in_itemsize)
             + _padded_2d_bytes(NC * C, 1, f32)
             + _padded_2d_bytes(C, 1, f32))
    return x_blk + o_blk + col + h + y + w


def _vmem_budget_bytes():
    """Per-generation budget: v7x has 64 MiB/TC, v5e/v6e have 128 MiB."""
    try:
        cap = int(pltpu.get_tpu_info().vmem_capacity_bytes)
    except Exception:
        cap = 64 * 1024 * 1024          # safe lower bound for every generation
    return max(16 * 1024 * 1024, min(int(cap * 0.6), 96 * 1024 * 1024))


def _pick_block_b(B, S, S_pad, C, NC, n_off, in_itemsize, budget, max_bt=16):
    """Largest batch tile that fits the padded-tile VMEM budget.

    max_bt also bounds the statically unrolled im2col copy count.
    """
    divs = [d for d in range(1, min(B, max_bt) + 1)
            if B % d == 0
            and _step_vmem_bytes(d, S, S_pad, C, NC, n_off, in_itemsize) <= budget]
    if not divs:
        return 1
    best = max(divs)
    if B // best < 2:
        # Prefer >=2 grid steps (keeps both v7x TensorCores / the DMA pipeline
        # busy) only if each step still has >=512 effective matmul columns.
        multi = [d for d in divs if B // d >= 2 and d * S >= 512]
        if multi:
            best = max(multi)
    return best


# -----------------------------------------------------------------------------
# Wrapper
# -----------------------------------------------------------------------------
def component_fusion_pallas(x, params, recon_weights, use_bf16=False):
    """x: [B, S, C] float32.  params: list of dicts with torch-layout weights."""
    B, S, C = x.shape
    NC = len(params)

    W1T, b1T, W2T, b2T, max_pad, n_off = _pack_weights(params, recon_weights, C)
    S_pad = S + 2 * max_pad
    H = NC * C

    cdtype = jnp.bfloat16 if use_bf16 else jnp.float32
    # NWC -> NCW + one global zero-pad of the sequence axis (layout plumbing).
    x_t = jnp.transpose(x.astype(jnp.float32), (0, 2, 1))
    x_t = jnp.pad(x_t, ((0, 0), (0, 0), (max_pad, max_pad))).astype(cdtype)
    w1 = W1T.astype(cdtype)
    w2 = W2T.astype(cdtype)

    itemsize = jnp.dtype(cdtype).itemsize
    budget = _vmem_budget_bytes()
    Bt = _pick_block_b(B, S, S_pad, C, NC, n_off, itemsize, budget)
    grid = (B // Bt,)

    flops = int(2 * H * (n_off * C) * B * S + 2 * C * H * B * S)
    bytes_accessed = int(x_t.size * itemsize + B * C * S * 4
                         + (w1.size + w2.size) * itemsize
                         + (b1T.size + b2T.size) * 4)

    kernel = functools.partial(_fusion_kernel, S=S, C=C, n_off=n_off, Bt=Bt)

    out_t = pl.pallas_call(
        kernel,
        out_shape=jax.ShapeDtypeStruct((B, C, S), jnp.float32),
        grid=grid,
        in_specs=[
            pl.BlockSpec((Bt, C, S_pad), lambda g: (g, 0, 0)),
            pl.BlockSpec((H, n_off * C), lambda g: (0, 0)),
            pl.BlockSpec((H, 1), lambda g: (0, 0)),
            pl.BlockSpec((C, H), lambda g: (0, 0)),
            pl.BlockSpec((C, 1), lambda g: (0, 0)),
        ],
        out_specs=pl.BlockSpec((Bt, C, S), lambda g: (g, 0, 0)),
        scratch_shapes=[pltpu.VMEM((n_off * C, Bt * S), cdtype)],
        compiler_params=pltpu.CompilerParams(
            dimension_semantics=("parallel",),
            vmem_limit_bytes=int(budget),
        ),
        cost_estimate=pl.CostEstimate(
            flops=flops, transcendentals=0, bytes_accessed=bytes_accessed),
    )(x_t, w1, b1T, w2, b2T)

    # NCW -> NWC
    return jnp.transpose(out_t, (0, 2, 1))


# -----------------------------------------------------------------------------
# Pure-JAX reference (matches PyTorch NCW Conv1d semantics)
# -----------------------------------------------------------------------------
def component_fusion_ref(x, params, recon_weights):
    xc = jnp.transpose(x, (0, 2, 1))  # [B, C, S]  (NCW)
    comps = []
    for p in params:
        y = lax.conv_general_dilated(
            xc, p["W1"], window_strides=(1,), padding=[(p["pad"], p["pad"])],
            dimension_numbers=("NCH", "OIH", "NCH"),
        ) + p["b1"][None, :, None]
        y = jnp.maximum(y, 0.0)
        y = lax.conv_general_dilated(
            y, p["W2"], window_strides=(1,), padding=[(0, 0)],
            dimension_numbers=("NCH", "OIH", "NCH"),
        ) + p["b2"][None, :, None]
        comps.append(y)
    w = jax.nn.softmax(recon_weights)
    fused = sum(w[i] * c for i, c in enumerate(comps))
    return jnp.transpose(fused, (0, 2, 1))


# -----------------------------------------------------------------------------
# Deterministic parameter construction (shapes from WaveletProcessor.__init__)
# -----------------------------------------------------------------------------
def make_params(key, enc_in, decomposition_levels):
    # trend: Conv1d(C,C,3,pad=1) ; details i=1..L: Conv1d(C,C,2**i+1,pad=2**i//2)
    kernel_pads = [(3, 1)] + [(2 ** i + 1, 2 ** i // 2)
                              for i in range(1, decomposition_levels + 1)]
    params = []
    for (K, P) in kernel_pads:
        key, k1, k2, k3, k4 = jax.random.split(key, 5)
        bound1 = 1.0 / (enc_in * K) ** 0.5
        bound2 = 1.0 / (enc_in * 1) ** 0.5
        params.append(dict(
            W1=jax.random.uniform(k1, (enc_in, enc_in, K), jnp.float32,
                                  -bound1, bound1),
            b1=jax.random.uniform(k2, (enc_in,), jnp.float32, -bound1, bound1),
            W2=jax.random.uniform(k3, (enc_in, enc_in, 1), jnp.float32,
                                  -bound2, bound2),
            b2=jax.random.uniform(k4, (enc_in,), jnp.float32, -bound2, bound2),
            pad=P,
        ))
    recon_weights = jnp.ones((decomposition_levels + 1,), jnp.float32) / (
        decomposition_levels + 1
    )
    return params, recon_weights


if __name__ == "__main__":
    B, S, C = 2, 16, 4          # batch, seq_len, enc_in
    LEVELS = 3                  # decomposition_levels

    key = jax.random.PRNGKey(0)
    key, kx = jax.random.split(key)
    x = jax.random.normal(kx, (B, S, C), jnp.float32)

    params, recon_weights = make_params(key, C, LEVELS)

    ref = component_fusion_ref(x, params, recon_weights)

    # f32 path (exact-tolerance correctness check).
    out = jax.block_until_ready(
        component_fusion_pallas(x, params, recon_weights, use_bf16=False))
    assert out.shape == (B, S, C)
    assert jnp.allclose(out, ref, atol=1e-4, rtol=1e-4), (
        float(jnp.max(jnp.abs(out - ref))))

    # bf16-operand path (v6e/v7x MXU-native operands, f32 accumulation).
    out_bf16 = jax.block_until_ready(
        component_fusion_pallas(x, params, recon_weights, use_bf16=True))
    assert jnp.allclose(out_bf16, ref, atol=5e-2, rtol=5e-2), (
        float(jnp.max(jnp.abs(out_bf16 - ref))))

    print("KERNEL_OK")
</pallas_src>

<mosaic_0001>
module attributes {stable_mosaic.version = 11 : i64} {
  func.func @_fusion_kernel(%arg0: i32, %arg1: memref<2x4x24xf32, #tpu.memory_space<vmem>>, %arg2: memref<16x36xf32, #tpu.memory_space<vmem>>, %arg3: memref<16x1xf32, #tpu.memory_space<vmem>>, %arg4: memref<4x16xf32, #tpu.memory_space<vmem>>, %arg5: memref<4x1xf32, #tpu.memory_space<vmem>>, %arg6: memref<2x4x16xf32, #tpu.memory_space<vmem>>, %arg7: memref<36x32xf32, #tpu.memory_space<vmem>>) attributes {dimension_semantics = [#tpu.dimension_semantics<parallel>], iteration_bounds = array<i64: 1>, scalar_prefetch = 0 : i64, scratch_operands = 1 : i64, tpu.core_type = #tpu.core_type<tc>, window_params = [{transform_indices = @transform_0, window_bounds = array<i64: 2, 4, 24>}, {pipeline_mode = #tpu.pipeline_mode<synchronous>, transform_indices = @transform_1, window_bounds = array<i64: 16, 36>}, {pipeline_mode = #tpu.pipeline_mode<synchronous>, transform_indices = @transform_2, window_bounds = array<i64: 16, 1>}, {pipeline_mode = #tpu.pipeline_mode<synchronous>, transform_indices = @transform_3, window_bounds = array<i64: 4, 16>}, {pipeline_mode = #tpu.pipeline_mode<synchronous>, transform_indices = @transform_4, window_bounds = array<i64: 4, 1>}, {transform_indices = @transform_5, window_bounds = array<i64: 2, 4, 16>}]} {
    %c0 = arith.constant 0 : index
    %c0_0 = arith.constant 0 : index
    %c0_1 = arith.constant 0 : index
    %0 = vector.load %arg1[%c0, %c0_0, %c0_1] : memref<2x4x24xf32, #tpu.memory_space<vmem>>, vector<1x4x24xf32>
    %1 = vector.shape_cast %0 : vector<1x4x24xf32> to vector<4x24xf32>
    %2 = vector.extract_strided_slice %1 {offsets = [0, 0], sizes = [4, 16], strides = [1, 1]} : vector<4x24xf32> to vector<4x16xf32>
    %c0_2 = arith.constant 0 : index
    %c0_3 = arith.constant 0 : index
    %3 = vector.load %arg7[%c0_2, %c0_3] : memref<36x32xf32, #tpu.memory_space<vmem>>, vector<4x16xf32>
    tpu.vector_store %arg7[%c0_2, %c0_3], %2 {strides = array<i32>} : memref<36x32xf32, #tpu.memory_space<vmem>>, vector<4x16xf32>,
    %4 = vector.extract_strided_slice %1 {offsets = [0, 1], sizes = [4, 16], strides = [1, 1]} : vector<4x24xf32> to vector<4x16xf32>
    %c4 = arith.constant 4 : index
    %c0_4 = arith.constant 0 : index
    %5 = vector.load %arg7[%c4, %c0_4] : memref<36x32xf32, #tpu.memory_space<vmem>>, vector<4x16xf32>
    tpu.vector_store %arg7[%c4, %c0_4], %4 {strides = array<i32>} : memref<36x32xf32, #tpu.memory_space<vmem>>, vector<4x16xf32>,
    %6 = vector.extract_strided_slice %1 {offsets = [0, 2], sizes = [4, 16], strides = [1, 1]} : vector<4x24xf32> to vector<4x16xf32>
    %c8 = arith.constant 8 : index
    %c0_5 = arith.constant 0 : index
    %7 = vector.load %arg7[%c8, %c0_5] : memref<36x32xf32, #tpu.memory_space<vmem>>, vector<4x16xf32>
    tpu.vector_store %arg7[%c8, %c0_5], %6 {strides = array<i32>} : memref<36x32xf32, #tpu.memory_space<vmem>>, vector<4x16xf32>,
    %8 = vector.extract_strided_slice %1 {offsets = [0, 3], sizes = [4, 16], strides = [1, 1]} : vector<4x24xf32> to vector<4x16xf32>
    %c12 = arith.constant 12 : index
    %c0_6 = arith.constant 0 : index
    %9 = vector.load %arg7[%c12, %c0_6] : memref<36x32xf32, #tpu.memory_space<vmem>>, vector<4x16xf32>
    tpu.vector_store %arg7[%c12, %c0_6], %8 {strides = array<i32>} : memref<36x32xf32, #tpu.memory_space<vmem>>, vector<4x16xf32>,
    %10 = vector.extract_strided_slice %1 {offsets = [0, 4], sizes = [4, 16], strides = [1, 1]} : vector<4x24xf32> to vector<4x16xf32>
    %c16 = arith.constant 16 : index
    %c0_7 = arith.constant 0 : index
    %11 = vector.load %arg7[%c16, %c0_7] : memref<36x32xf32, #tpu.memory_space<vmem>>, vector<4x16xf32>
    tpu.vector_store %arg7[%c16, %c0_7], %10 {strides = array<i32>} : memref<36x32xf32, #tpu.memory_space<vmem>>, vector<4x16xf32>,
    %12 = vector.extract_strided_slice %1 {offsets = [0, 5], sizes = [4, 16], strides = [1, 1]} : vector<4x24xf32> to vector<4x16xf32>
    %c20 = arith.constant 20 : index
    %c0_8 = arith.constant 0 : index
    %13 = vector.load %arg7[%c20, %c0_8] : memref<36x32xf32, #tpu.memory_space<vmem>>, vector<4x16xf32>
    tpu.vector_store %arg7[%c20, %c0_8], %12 {strides = array<i32>} : memref<36x32xf32, #tpu.memory_space<vmem>>, vector<4x16xf32>,
    %14 = vector.extract_strided_slice %1 {offsets = [0, 6], sizes = [4, 16], strides = [1, 1]} : vector<4x24xf32> to vector<4x16xf32>
    %c24 = arith.constant 24 : index
    %c0_9 = arith.constant 0 : index
    %15 = vector.load %arg7[%c24, %c0_9] : memref<36x32xf32, #tpu.memory_space<vmem>>, vector<4x16xf32>
    tpu.vector_store %arg7[%c24, %c0_9], %14 {strides = array<i32>} : memref<36x32xf32, #tpu.memory_space<vmem>>, vector<4x16xf32>,
    %16 = vector.extract_strided_slice %1 {offsets = [0, 7], sizes = [4, 16], strides = [1, 1]} : vector<4x24xf32> to vector<4x16xf32>
    %c28 = arith.constant 28 : index
    %c0_10 = arith.constant 0 : index
    %17 = vector.load %arg7[%c28, %c0_10] : memref<36x32xf32, #tpu.memory_space<vmem>>, vector<4x16xf32>
    tpu.vector_store %arg7[%c28, %c0_10], %16 {strides = array<i32>} : memref<36x32xf32, #tpu.memory_space<vmem>>, vector<4x16xf32>,
    %18 = vector.extract_strided_slice %1 {offsets = [0, 8], sizes = [4, 16], strides = [1, 1]} : vector<4x24xf32> to vector<4x16xf32>
    %c32 = arith.constant 32 : index
    %c0_11 = arith.constant 0 : index
    %19 = vector.load %arg7[%c32, %c0_11] : memref<36x32xf32, #tpu.memory_space<vmem>>, vector<4x16xf32>
    tpu.vector_store %arg7[%c32, %c0_11], %18 {strides = array<i32>} : memref<36x32xf32, #tpu.memory_space<vmem>>, vector<4x16xf32>,
    %c1 = arith.constant 1 : index
    %c0_12 = arith.constant 0 : index
    %c0_13 = arith.constant 0 : index
    %20 = vector.load %arg1[%c1, %c0_12, %c0_13] : memref<2x4x24xf32, #tpu.memory_space<vmem>>, vector<1x4x24xf32>
    %21 = vector.shape_cast %20 : vector<1x4x24xf32> to vector<4x24xf32>
    %22 = vector.extract_strided_slice %21 {offsets = [0, 0], sizes = [4, 16], strides = [1, 1]} : vector<4x24xf32> to vector<4x16xf32>
    %c0_14 = arith.constant 0 : index
    %c16_15 = arith.constant 16 : index
    %23 = vector.load %arg7[%c0_14, %c16_15] : memref<36x32xf32, #tpu.memory_space<vmem>>, vector<4x16xf32>
    tpu.vector_store %arg7[%c0_14, %c16_15], %22 {strides = array<i32>} : memref<36x32xf32, #tpu.memory_space<vmem>>, vector<4x16xf32>,
    %24 = vector.extract_strided_slice %21 {offsets = [0, 1], sizes = [4, 16], strides = [1, 1]} : vector<4x24xf32> to vector<4x16xf32>
    %c4_16 = arith.constant 4 : index
    %c16_17 = arith.constant 16 : index
    %25 = vector.load %arg7[%c4_16, %c16_17] : memref<36x32xf32, #tpu.memory_space<vmem>>, vector<4x16xf32>
    tpu.vector_store %arg7[%c4_16, %c16_17], %24 {strides = array<i32>} : memref<36x32xf32, #tpu.memory_space<vmem>>, vector<4x16xf32>,
    %26 = vector.extract_strided_slice %21 {offsets = [0, 2], sizes = [4, 16], strides = [1, 1]} : vector<4x24xf32> to vector<4x16xf32>
    %c8_18 = arith.constant 8 : index
    %c16_19 = arith.constant 16 : index
    %27 = vector.load %arg7[%c8_18, %c16_19] : memref<36x32xf32, #tpu.memory_space<vmem>>, vector<4x16xf32>
    tpu.vector_store %arg7[%c8_18, %c16_19], %26 {strides = array<i32>} : memref<36x32xf32, #tpu.memory_space<vmem>>, vector<4x16xf32>,
    %28 = vector.extract_strided_slice %21 {offsets = [0, 3], sizes = [4, 16], strides = [1, 1]} : vector<4x24xf32> to vector<4x16xf32>
    %c12_20 = arith.constant 12 : index
    %c16_21 = arith.constant 16 : index
    %29 = vector.load %arg7[%c12_20, %c16_21] : memref<36x32xf32, #tpu.memory_space<vmem>>, vector<4x16xf32>
    tpu.vector_store %arg7[%c12_20, %c16_21], %28 {strides = array<i32>} : memref<36x32xf32, #tpu.memory_space<vmem>>, vector<4x16xf32>,
    %30 = vector.extract_strided_slice %21 {offsets = [0, 4], sizes = [4, 16], strides = [1, 1]} : vector<4x24xf32> to vector<4x16xf32>
    %c16_22 = arith.constant 16 : index
    %c16_23 = arith.constant 16 : index
    %31 = vector.load %arg7[%c16_22, %c16_23] : memref<36x32xf32, #tpu.memory_space<vmem>>, vector<4x16xf32>
    tpu.vector_store %arg7[%c16_22, %c16_23], %30 {strides = array<i32>} : memref<36x32xf32, #tpu.memory_space<vmem>>, vector<4x16xf32>,
    %32 = vector.extract_strided_slice %21 {offsets = [0, 5], sizes = [4, 16], strides = [1, 1]} : vector<4x24xf32> to vector<4x16xf32>
    %c20_24 = arith.constant 20 : index
    %c16_25 = arith.constant 16 : index
    %33 = vector.load %arg7[%c20_24, %c16_25] : memref<36x32xf32, #tpu.memory_space<vmem>>, vector<4x16xf32>
    tpu.vector_store %arg7[%c20_24, %c16_25], %32 {strides = array<i32>} : memref<36x32xf32, #tpu.memory_space<vmem>>, vector<4x16xf32>,
    %34 = vector.extract_strided_slice %21 {offsets = [0, 6], sizes = [4, 16], strides = [1, 1]} : vector<4x24xf32> to vector<4x16xf32>
    %c24_26 = arith.constant 24 : index
    %c16_27 = arith.constant 16 : index
    %35 = vector.load %arg7[%c24_26, %c16_27] : memref<36x32xf32, #tpu.memory_space<vmem>>, vector<4x16xf32>
    tpu.vector_store %arg7[%c24_26, %c16_27], %34 {strides = array<i32>} : memref<36x32xf32, #tpu.memory_space<vmem>>, vector<4x16xf32>,
    %36 = vector.extract_strided_slice %21 {offsets = [0, 7], sizes = [4, 16], strides = [1, 1]} : vector<4x24xf32> to vector<4x16xf32>
    %c28_28 = arith.constant 28 : index
    %c16_29 = arith.constant 16 : index
    %37 = vector.load %arg7[%c28_28, %c16_29] : memref<36x32xf32, #tpu.memory_space<vmem>>, vector<4x16xf32>
    tpu.vector_store %arg7[%c28_28, %c16_29], %36 {strides = array<i32>} : memref<36x32xf32, #tpu.memory_space<vmem>>, vector<4x16xf32>,
    %38 = vector.extract_strided_slice %21 {offsets = [0, 8], sizes = [4, 16], strides = [1, 1]} : vector<4x24xf32> to vector<4x16xf32>
    %c32_30 = arith.constant 32 : index
    %c16_31 = arith.constant 16 : index
    %39 = vector.load %arg7[%c32_30, %c16_31] : memref<36x32xf32, #tpu.memory_space<vmem>>, vector<4x16xf32>
    tpu.vector_store %arg7[%c32_30, %c16_31], %38 {strides = array<i32>} : memref<36x32xf32, #tpu.memory_space<vmem>>, vector<4x16xf32>,
    %c0_32 = arith.constant 0 : index
    %c0_33 = arith.constant 0 : index
    %40 = vector.load %arg2[%c0_32, %c0_33] : memref<16x36xf32, #tpu.memory_space<vmem>>, vector<16x36xf32>
    %c0_34 = arith.constant 0 : index
    %c0_35 = arith.constant 0 : index
    %41 = vector.load %arg7[%c0_34, %c0_35] : memref<36x32xf32, #tpu.memory_space<vmem>>, vector<36x32xf32>
    %cst = arith.constant dense<0.000000e+00> : vector<16x32xf32>
    %42 = tpu.matmul %40, %41, %cst {dimension_numbers = #tpu.dot_dimension_numbers<[1], [0], [0], [1], [0, 0, 1, 1], [], []>} : vector<16x36xf32>, vector<36x32xf32>, vector<16x32xf32> -> vector<16x32xf32>
    %c0_36 = arith.constant 0 : index
    %c0_37 = arith.constant 0 : index
    %43 = vector.load %arg3[%c0_36, %c0_37] : memref<16x1xf32, #tpu.memory_space<vmem>>, vector<16x1xf32>
    %44 = vector.broadcast %43 : vector<16x1xf32> to vector<16x32xf32>
    %45 = arith.addf %42, %44 : vector<16x32xf32>
    %cst_38 = arith.constant 0.000000e+00 : f32
    %46 = vector.broadcast %cst_38 : f32 to vector<16x32xf32>
    %47 = arith.maximumf %45, %46 : vector<16x32xf32>
    %c0_39 = arith.constant 0 : index
    %c0_40 = arith.constant 0 : index
    %48 = vector.load %arg4[%c0_39, %c0_40] : memref<4x16xf32, #tpu.memory_space<vmem>>, vector<4x16xf32>
    %cst_41 = arith.constant dense<0.000000e+00> : vector<4x32xf32>
    %49 = tpu.matmul %48, %47, %cst_41 {dimension_numbers = #tpu.dot_dimension_numbers<[1], [0], [0], [1], [0, 0, 1, 1], [], []>} : vector<4x16xf32>, vector<16x32xf32>, vector<4x32xf32> -> vector<4x32xf32>
    %c0_42 = arith.constant 0 : index
    %c0_43 = arith.constant 0 : index
    %50 = vector.load %arg5[%c0_42, %c0_43] : memref<4x1xf32, #tpu.memory_space<vmem>>, vector<4x1xf32>
    %51 = vector.broadcast %50 : vector<4x1xf32> to vector<4x32xf32>
    %52 = arith.addf %49, %51 : vector<4x32xf32>
    %53 = vector.extract_strided_slice %52 {offsets = [0, 0], sizes = [4, 16], strides = [1, 1]} : vector<4x32xf32> to vector<4x16xf32>
    %c0_44 = arith.constant 0 : index
    %c0_45 = arith.constant 0 : index
    %c0_46 = arith.constant 0 : index
    %54 = vector.load %arg6[%c0_44, %c0_45, %c0_46] : memref<2x4x16xf32, #tpu.memory_space<vmem>>, vector<1x4x16xf32>
    %55 = vector.shape_cast %54 : vector<1x4x16xf32> to vector<4x16xf32>
    %56 = vector.shape_cast %53 : vector<4x16xf32> to vector<1x4x16xf32>
    tpu.vector_store %arg6[%c0_44, %c0_45, %c0_46], %56 {strides = array<i32>} : memref<2x4x16xf32, #tpu.memory_space<vmem>>, vector<1x4x16xf32>,
    %57 = vector.extract_strided_slice %52 {offsets = [0, 16], sizes = [4, 16], strides = [1, 1]} : vector<4x32xf32> to vector<4x16xf32>
    %c1_47 = arith.constant 1 : index
    %c0_48 = arith.constant 0 : index
    %c0_49 = arith.constant 0 : index
    %58 = vector.load %arg6[%c1_47, %c0_48, %c0_49] : memref<2x4x16xf32, #tpu.memory_space<vmem>>, vector<1x4x16xf32>
    %59 = vector.shape_cast %58 : vector<1x4x16xf32> to vector<4x16xf32>
    %60 = vector.shape_cast %57 : vector<4x16xf32> to vector<1x4x16xf32>
    tpu.vector_store %arg6[%c1_47, %c0_48, %c0_49], %60 {strides = array<i32>} : memref<2x4x16xf32, #tpu.memory_space<vmem>>, vector<1x4x16xf32>,
    return
  }
  func.func @transform_0(%arg0: i32) -> (i32, i32, i32) {
    %c0_i32 = arith.constant 0 : i32
    %c0_i32_0 = arith.constant 0 : i32
    %c0_i32_1 = arith.constant 0 : i32
    return %arg0, %c0_i32, %c0_i32_0 : i32, i32, i32
  }
  func.func @transform_1(%arg0: i32) -> (i32, i32) {
    %c0_i32 = arith.constant 0 : i32
    %c0_i32_0 = arith.constant 0 : i32
    %c0_i32_1 = arith.constant 0 : i32
    return %c0_i32, %c0_i32_0 : i32, i32
  }
  func.func @transform_2(%arg0: i32) -> (i32, i32) {
    %c0_i32 = arith.constant 0 : i32
    %c0_i32_0 = arith.constant 0 : i32
    %c0_i32_1 = arith.constant 0 : i32
    return %c0_i32, %c0_i32_0 : i32, i32
  }
  func.func @transform_3(%arg0: i32) -> (i32, i32) {
    %c0_i32 = arith.constant 0 : i32
    %c0_i32_0 = arith.constant 0 : i32
    %c0_i32_1 = arith.constant 0 : i32
    return %c0_i32, %c0_i32_0 : i32, i32
  }
  func.func @transform_4(%arg0: i32) -> (i32, i32) {
    %c0_i32 = arith.constant 0 : i32
    %c0_i32_0 = arith.constant 0 : i32
    %c0_i32_1 = arith.constant 0 : i32
    return %c0_i32, %c0_i32_0 : i32, i32
  }
  func.func @transform_5(%arg0: i32) -> (i32, i32, i32) {
    %c0_i32 = arith.constant 0 : i32
    %c0_i32_0 = arith.constant 0 : i32
    %c0_i32_1 = arith.constant 0 : i32
    return %arg0, %c0_i32, %c0_i32_0 : i32, i32, i32
  }
}

</mosaic_0001>

<llo_original>
// kernel: tpu_custom_call.1
$region0: #{tpu_custom_call.1}
  #allocation0 [shape = 'u32[]', space=smem, size = 0x4, offset = 0x4, fixed_abs, tag = 'smem constant byte address 0x4 - core index']
  #allocation1 [shape = 'u32[72,128]{1,0:T(1,128)}', space=vmem, size = 0x9000, scoped, tag = 'internal scratch']
  #allocation2 [shape = 'f32[36,32]{1,0:T(8,128)}', space=vmem, size = 0x5000, scoped, tag = 'scratch operand']
  %s0 = inlined_call_operand.hbm [shape: f32[2,4,24], index: 0, kind: input, shape index: {}]
  %s1 = inlined_call_operand.vmem [shape: f32[16,36], index: 1, kind: input, shape index: {}]
  %s2 = inlined_call_operand.vmem [shape: f32[16,1], index: 2, kind: input, shape index: {}]
  %s3 = inlined_call_operand.vmem [shape: f32[4,16], index: 3, kind: input, shape index: {}]
  %s4 = inlined_call_operand.vmem [shape: f32[4,1], index: 4, kind: input, shape index: {}]
  %s5 = inlined_call_operand.hbm [shape: f32[2,4,16], index: 5, kind: output, shape index: {}]
  %s6 = sld [smem:[#allocation0]]
  $region34: #{tpu_custom_call.1} parent=0
    _
  %s8 = ssub.s32 1, %s6
  %s9 = scalar_select 0, %s8, %s6
  $region1: #{tpu_custom_call.1} parent=0
    #allocation3 [shape = 'u8[4096]{0}', space=vmem, size = 0x1000, scoped, tag = 'input window, operand 0, single buffered']
    #allocation4 [shape = 's32[1]{0}', space=sflag, size = 0x4, scoped, tag = 'scoped memory for tpu_custom_call.1']
    #allocation5 [shape = 's32[1]{0}', space=sflag, size = 0x4, scoped, tag = 'scoped memory for tpu_custom_call.1']
    #allocation6 [shape = 'u8[4096]{0}', space=vmem, size = 0x1000, scoped, tag = 'output window, operand 0, single buffered']
    %10 = vsyncpa [#allocation4], 0
    %11 = vsyncpa [#allocation5], 0
    // Predicated region
    $region2: #{tpu_custom_call.1} parent=1 // pred_check
      _
    $region3: #{tpu_custom_call.1} parent=1 // pred_check_branch
      %13 = sbr.rel (0) target = $region5
    $region4: #{tpu_custom_call.1} parent=1 // pred_region
      %15 = vsyncadd [#allocation4], 0
      %s16 = sshll.u32 %s0, 4
      %s17 = int_to_ptr.hbm [resolvable:$true] %s16
      %s18 = sshll.u32 [#allocation3], 4
      %s19 = int_to_ptr.vmem [resolvable:$true] %s18
      %24 = dma.hbm_to_vmem [thread:$0]  %s17, 128, %s19, [#allocation4], 64, 64, 4
    $region5: #{tpu_custom_call.1} parent=1 // pred_fallthru
      _
    // Predicated region
    $region6: #{tpu_custom_call.1} parent=1 // pred_check
      _
    $region7: #{tpu_custom_call.1} parent=1 // pred_check_branch
      %26 = sbr.rel (0) target = $region9
    $region8: #{tpu_custom_call.1} parent=1 // pred_region
      _
    $region9: #{tpu_custom_call.1} parent=1 // pred_fallthru
      _
    // Predicated region
    $region10: #{tpu_custom_call.1} parent=1 // pred_check
      _
    $region11: #{tpu_custom_call.1} parent=1 // pred_check_branch
      %28 = sbr.rel (0) target = $region13
    $region12: #{tpu_custom_call.1} parent=1 // pred_region
      _
    $region13: #{tpu_custom_call.1} parent=1 // pred_fallthru
      _
    // Predicated region
    $region14: #{tpu_custom_call.1} parent=1 // pred_check
      _
    $region15: #{tpu_custom_call.1} parent=1 // pred_check_branch
      %30 = sbr.rel (0) target = $region17
    $region16: #{tpu_custom_call.1} parent=1 // pred_region
      _
    $region17: #{tpu_custom_call.1} parent=1 // pred_fallthru
      _
    // Predicated region
    $region18: #{tpu_custom_call.1} parent=1 // pred_check
      _
    $region19: #{tpu_custom_call.1} parent=1 // pred_check_branch
      %32 = sbr.rel (0) target = $region21
    $region20: #{tpu_custom_call.1} parent=1 // pred_region
      _
    $region21: #{tpu_custom_call.1} parent=1 // pred_fallthru
      _
    // Predicated region
    $region22: #{tpu_custom_call.1} parent=1 // pred_check
      _
    $region23: #{tpu_custom_call.1} parent=1 // pred_check_branch
      %34 = sbr.rel (0) target = $region25
    $region24: #{tpu_custom_call.1} parent=1 // pred_region
      %36 = dma.done [#allocation4], 128
    $region25: #{tpu_custom_call.1} parent=1 // pred_fallthru
      _
    %v37 = vld [vmem:[#allocation3] sm:$0xf]
    %vm38 = vcmask 125952
    %39 = vst.msk [vmem:[#allocation2] sm:$0xf] %vm38, %v37
    %41 = vrot.lane.b32.xlu0 %v37, 127
    %v42 = vpop.permute.xlu0 %41
    %44 = vst.msk [vmem:[#allocation2 + $0x4] sm:$0xf] %vm38, %v42
    %45 = vrot.lane.b32.xlu0 %v37, 126
    %v46 = vpop.permute.xlu0 %45
    %48 = vst.msk [vmem:[#allocation2 + $0x8] sm:$0xf] %vm38, %v46
    %49 = vrot.lane.b32.xlu0 %v37, 125
    %v50 = vpop.permute.xlu0 %49
    %52 = vst.msk [vmem:[#allocation2 + $0xc] sm:$0xf] %vm38, %v50
    %53 = vrot.lane.b32.xlu0 %v37, 124
    %v54 = vpop.permute.xlu0 %53
    %56 = vst.msk [vmem:[#allocation2 + $0x10] sm:$0xf] %vm38, %v54
    %57 = vrot.lane.b32.xlu0 %v37, 123
    %v58 = vpop.permute.xlu0 %57
    %60 = vst.msk [vmem:[#allocation2 + $0x14] sm:$0xf] %vm38, %v58
    %61 = vrot.lane.b32.xlu0 %v37, 122
    %v62 = vpop.permute.xlu0 %61
    %64 = vst.msk [vmem:[#allocation2 + $0x18] sm:$0xf] %vm38, %v62
    %65 = vrot.lane.b32.xlu0 %v37, 121
    %v66 = vpop.permute.xlu0 %65
    %68 = vst.msk [vmem:[#allocation2 + $0x1c] sm:$0xf] %vm38, %v66
    %69 = vrot.lane.b32.xlu0 %v37, 120
    %v70 = vpop.permute.xlu0 %69
    %72 = vst.msk [vmem:[#allocation2 + $0x20] sm:$0xf] %vm38, %v70
    %s73 = scalar_lea.vmem [#allocation3], 4
    %v74 = vld [vmem:[%s73] sm:$0xf]
    %76 = vrot.lane.b32.xlu0 %v74, 16
    %v77 = vpop.permute.xlu0 %76
    %vm79 = vcmask 257152
    %80 = vst.msk [vmem:[#allocation2] sm:$0xf] %vm79, %v77
    %81 = vrot.lane.b32.xlu0 %v74, 15
    %v82 = vpop.permute.xlu0 %81
    %84 = vst.msk [vmem:[#allocation2 + $0x4] sm:$0xf] %vm79, %v82
    %85 = vrot.lane.b32.xlu0 %v74, 14
    %v86 = vpop.permute.xlu0 %85
    %88 = vst.msk [vmem:[#allocation2 + $0x8] sm:$0xf] %vm79, %v86
    %89 = vrot.lane.b32.xlu0 %v74, 13
    %v90 = vpop.permute.xlu0 %89
    %92 = vst.msk [vmem:[#allocation2 + $0xc] sm:$0xf] %vm79, %v90
    %93 = vrot.lane.b32.xlu0 %v74, 12
    %v94 = vpop.permute.xlu0 %93
    %96 = vst.msk [vmem:[#allocation2 + $0x10] sm:$0xf] %vm79, %v94
    %97 = vrot.lane.b32.xlu0 %v74, 11
    %v98 = vpop.permute.xlu0 %97
    %100 = vst.msk [vmem:[#allocation2 + $0x14] sm:$0xf] %vm79, %v98
    %101 = vrot.lane.b32.xlu0 %v74, 10
    %v102 = vpop.permute.xlu0 %101
    %104 = vst.msk [vmem:[#allocation2 + $0x18] sm:$0xf] %vm79, %v102
    %105 = vrot.lane.b32.xlu0 %v74, 9
    %v106 = vpop.permute.xlu0 %105
    %108 = vst.msk [vmem:[#allocation2 + $0x1c] sm:$0xf] %vm79, %v106
    %109 = vrot.lane.b32.xlu0 %v74, 8
    %v110 = vpop.permute.xlu0 %109
    %112 = vst.msk [vmem:[#allocation2 + $0x20] sm:$0xf] %vm79, %v110
    %v113 = vld [vmem:[%s1] sm:$0xff]
    %v114 = vld [vmem:[%s1 + $0x8] sm:$0xff]
    %v115 = vld [vmem:[#allocation2] sm:$0xff]
    %v116 = vld [vmem:[#allocation2 + $0x8] sm:$0xff]
    %v117 = vld [vmem:[#allocation2 + $0x10] sm:$0xff]
    %v118 = vld [vmem:[#allocation2 + $0x18] sm:$0xff]
    %v119 = vld [vmem:[#allocation2 + $0x20] sm:$0xf]
    %v120 = vld [vmem:[%s2] sm:$0xff]
    %v121 = vld [vmem:[%s2 + $0x8] sm:$0xff]
    %123 = vset.pattern.permute.xlu0 0
    %124 = vperm.xlu0 %123, %v120
    %v125 = vpop.permute.xlu0 %124
    %128 = vset.pattern.permute.xlu0 0
    %129 = vperm.xlu0 %128, %v121
    %v130 = vpop.permute.xlu0 %129
    %vm132 = vcmask 293888
    %v134 = vsel %vm132, %v113, 0
    %v137 = vsel %vm132, %v114, 0
    %vm139 = vcmask 1043456
    %v141 = vsel %vm139, %v119, 0
    %143 = vmatpush.msra.mxu0 0.0
    %144 = vmatpush.msra.mxu0 0.0
    %145 = vmatpush.msra.mxu0 0.0
    %146 = vmatpush.msra.mxu0 0.0
    %147 = vmatpush.msra.mxu0 0.0
    %148 = vmatpush.msra.mxu0 0.0
    %149 = vmatpush.msra.mxu0 0.0
    %150 = vmatpush.msra.mxu0 0.0
    %151 = vmatpush.msra.mxu0 0.0
    %152 = vmatpush.msra.mxu0 0.0
    %153 = vmatpush.msra.mxu0 0.0
    %154 = vmatpush.msra.mxu0 %v141
    %155 = vmatpush.msra.mxu0 %v118
    %156 = vmatpush.msra.mxu0 %v117
    %157 = vmatpush.msra.mxu0 %v116
    %158 = vmatpush.msra.mxu0 %v115
    %159 = vmatmul.f32.gmra.mxu0 %v134
    %v160 = vpop.f32.mrf.mxu0
    %v161 = vadd.f32 %v125, %v160
    %162 = vmatmul.f32.gmra.mxu0 %v137
    %v163 = vpop.f32.mrf.mxu0
    %v164 = vadd.f32 %v130, %v163
    %165 = vdwg.mxu0
    %v166 = vmax.f32 %v161, 0.0
    %v167 = vmax.f32 %v164, 0.0
    %v168 = vld [vmem:[%s3] sm:$0xf]
    %v169 = vld [vmem:[%s4] sm:$0xf]
    %171 = vset.pattern.permute.xlu0 0
    %172 = vperm.xlu0 %171, %v169
    %v173 = vpop.permute.xlu0 %172
    %vm175 = vcmask 130048
    %v177 = vsel %vm175, %v168, 0
    %179 = vmatpush.msra.mxu0 0.0
    %180 = vmatpush.msra.mxu0 0.0
    %181 = vmatpush.msra.mxu0 0.0
    %182 = vmatpush.msra.mxu0 0.0
    %183 = vmatpush.msra.mxu0 0.0
    %184 = vmatpush.msra.mxu0 0.0
    %185 = vmatpush.msra.mxu0 0.0
    %186 = vmatpush.msra.mxu0 0.0
    %187 = vmatpush.msra.mxu0 0.0
    %188 = vmatpush.msra.mxu0 0.0
    %189 = vmatpush.msra.mxu0 0.0
    %190 = vmatpush.msra.mxu0 0.0
    %191 = vmatpush.msra.mxu0 0.0
    %192 = vmatpush.msra.mxu0 0.0
    %193 = vmatpush.msra.mxu0 %v167
    %194 = vmatpush.msra.mxu0 %v166
    %195 = vmatmul.f32.gmra.mxu0 %v177
    %v196 = vpop.f32.mrf.mxu0
    %v197 = vadd.f32 %v173, %v196
    %198 = vdwg.mxu0
    %199 = vst.msk [vmem:[#allocation6] sm:$0xf] %vm38, %v197
    %201 = vrot.lane.b32.xlu0 %v197, 112
    %v202 = vpop.permute.xlu0 %201
    %s204 = scalar_lea.vmem [#allocation6], 4
    %205 = vst.msk [vmem:[%s204] sm:$0xf] %vm38, %v202
    // Predicated region
    $region26: #{tpu_custom_call.1} parent=1 // pred_check
      _
    $region27: #{tpu_custom_call.1} parent=1 // pred_check_branch
      %207 = sbr.rel (0) target = $region29
    $region28: #{tpu_custom_call.1} parent=1 // pred_region
      %209 = vsyncadd [#allocation5], 0
      %s210 = sshll.u32 [#allocation6], 4
      %s211 = int_to_ptr.vmem [resolvable:$true] %s210
      %s212 = sshll.u32 %s5, 4
      %s213 = int_to_ptr.hbm [resolvable:$true] %s212
      %218 = dma.vmem_to_hbm [thread:$0]  %s211, 128, %s213, [#allocation5], 64, 64, 4
    $region29: #{tpu_custom_call.1} parent=1 // pred_fallthru
      _
    // Predicated region
    $region30: #{tpu_custom_call.1} parent=1 // pred_check
      _
    $region31: #{tpu_custom_call.1} parent=1 // pred_check_branch
      %220 = sbr.rel (0) target = $region33
    $region32: #{tpu_custom_call.1} parent=1 // pred_region
      %222 = dma.done [#allocation5], 128
    $region33: #{tpu_custom_call.1} parent=1 // pred_fallthru
      _
    %223 = vsyncpa [#allocation4], 1
    %224 = vsyncpa [#allocation5], 1

</llo_original>
